<compile_context>
chip_gen: v5e
topology: v5e:2x2
jax: 0.10.0
libtpu: 0.0.40
codegen_flags: <defaults>
</compile_context>

<pallas_src>
import jax
import jax.numpy as jnp
from jax.experimental import pallas as pl
from jax.experimental.pallas import tpu as pltpu


def _mrconv_kernel(lab_ref, d_ref, w_lab_ref, w_d_ref, b_ref, out_ref):
    # lab_ref, d_ref : (C, TN)  channels on sublanes, nodes on lanes
    # w_lab_ref      : (C, C)   weight columns acting on lab   (w[:, 0::2])
    # w_d_ref        : (C, C)   weight columns acting on d     (w[:, 1::2])
    # b_ref          : (C, 1)   bias
    acc = jnp.dot(w_lab_ref[...], lab_ref[...], preferred_element_type=jnp.float32)
    acc = acc + jnp.dot(w_d_ref[...], d_ref[...], preferred_element_type=jnp.float32)
    acc = acc + b_ref[...]
    out_ref[...] = jnp.maximum(acc, 0.0).astype(out_ref.dtype)


def graph_conv2d_plg(x, edge_index, y, weight, bias):
    """x: (B, C, N, 1) f32 (lab_x, NCHW), y: (B, C, M, 1) f32 (patch_x),
    edge_index: (2, B, N, K) i32, weight: (C, 2C, 1, 1) f32 Conv2d weight,
    bias: (C,) f32.  Returns (B, C, N, 1) f32."""
    B, C, N, _ = x.shape
    lab = x[..., 0]      # (B, C, N)
    patch = y[..., 0]    # (B, C, M)

    # Fused gather + max-relative in XLA; only d:(B, C, N) is materialized.
    # TODO(synk): move the gather in-kernel (scalar-prefetch edge_index + lane
    # gather / DMA gather) once that path is worth the complexity.
    gather = jax.vmap(lambda xb, ib: xb[:, ib])
    x_i = gather(lab, edge_index[1])          # (B, C, N, K)
    x_j = gather(patch, edge_index[0])        # (B, C, N, K)
    d = jnp.max(x_i - x_j, axis=-1)           # (B, C, N)

    # De-interleave the 1x1-conv weight so [lab; d] never has to be
    # concatenated (PyTorch's interleaved cat puts lab in even channels, d in
    # odd channels of the 2C input).
    w = weight[:, :, 0, 0]                    # (C, 2C)
    w_lab = w[:, 0::2]                        # (C, C)  acts on lab
    w_d = w[:, 1::2]                          # (C, C)  acts on d
    b = bias.reshape(C, 1)

    # Lane-dense node tiles; ragged tail handled by Pallas boundary masking.
    TN = min(512, pl.cdiv(N, 128) * 128)
    grid = (B, pl.cdiv(N, TN))

    out = pl.pallas_call(
        _mrconv_kernel,
        out_shape=jax.ShapeDtypeStruct((B, C, N), x.dtype),
        grid=grid,
        in_specs=[
            pl.BlockSpec((None, C, TN), lambda bi, ni: (bi, 0, ni)),
            pl.BlockSpec((None, C, TN), lambda bi, ni: (bi, 0, ni)),
            pl.BlockSpec((C, C), lambda bi, ni: (0, 0)),
            pl.BlockSpec((C, C), lambda bi, ni: (0, 0)),
            pl.BlockSpec((C, 1), lambda bi, ni: (0, 0)),
        ],
        out_specs=pl.BlockSpec((None, C, TN), lambda bi, ni: (bi, 0, ni)),
        compiler_params=pltpu.CompilerParams(
            dimension_semantics=("parallel", "parallel")),
    )(lab, d, w_lab, w_d, b)

    return out[..., None]   # (B, C, N, 1), matches PyTorch NCHW output


# ----- pure-JAX reference mirroring the PyTorch forward -----
def _batched_index_select(x, idx):
    xf = x[..., 0]                                        # (B, C, M)
    return jax.vmap(lambda xb, ib: xb[:, ib])(xf, idx)    # (B, C, N, K)


def reference(x, edge_index, y, weight, bias):
    x_i = _batched_index_select(x, edge_index[1])
    x_j = _batched_index_select(y, edge_index[0])
    d = jnp.max(x_i - x_j, axis=-1, keepdims=True)                  # (B, C, N, 1)
    B, C, N, _ = x.shape
    cat = jnp.concatenate([x[:, :, None], d[:, :, None]], axis=2)   # (B, C, 2, N, 1)
    cat = cat.reshape(B, 2 * C, N, 1)                               # interleaved channels
    out = jnp.einsum("oc,bcnk->bonk", weight[:, :, 0, 0], cat)
    out = out + bias[None, :, None, None]
    return jax.nn.relu(out)


if __name__ == "__main__":
    key = jax.random.PRNGKey(0)
    B, C, N, M, K = 2, 4, 16, 16, 8
    k1, k2, k3, k4, k5, k6 = jax.random.split(key, 6)

    x = jax.random.normal(k1, (B, C, N, 1), jnp.float32)           # lab_x (NCHW)
    y = jax.random.normal(k2, (B, C, M, 1), jnp.float32)           # patch_x
    e0 = jax.random.randint(k3, (B, N, K), 0, M)                   # indexes into y
    e1 = jax.random.randint(k4, (B, N, K), 0, N)                   # indexes into x
    edge_index = jnp.stack([e0, e1], axis=0).astype(jnp.int32)     # (2, B, N, K)

    # deterministic synthetic params for Conv2d(2C, C, 1, bias=True)
    weight = 0.1 * jax.random.normal(k5, (C, 2 * C, 1, 1), jnp.float32)
    bias = 0.1 * jax.random.normal(k6, (C,), jnp.float32)

    out = graph_conv2d_plg(x, edge_index, y, weight, bias)
    out = jax.block_until_ready(out)

    ref = reference(x, edge_index, y, weight, bias)
    assert out.shape == (B, C, N, 1), out.shape
    assert jnp.allclose(out, ref, atol=1e-5, rtol=1e-5), "mismatch vs reference"
    print("KERNEL_OK")
</pallas_src>

<mosaic_0001>
module attributes {stable_mosaic.version = 11 : i64} {
  func.func @_mrconv_kernel(%arg0: i32, %arg1: i32, %arg2: memref<1x4x128xf32, #tpu.memory_space<vmem>>, %arg3: memref<1x4x128xf32, #tpu.memory_space<vmem>>, %arg4: memref<4x4xf32, #tpu.memory_space<vmem>>, %arg5: memref<4x4xf32, #tpu.memory_space<vmem>>, %arg6: memref<4x1xf32, #tpu.memory_space<vmem>>, %arg7: memref<1x4x128xf32, #tpu.memory_space<vmem>>) attributes {dimension_semantics = [#tpu.dimension_semantics<parallel>, #tpu.dimension_semantics<parallel>], iteration_bounds = array<i64: 2, 1>, scalar_prefetch = 0 : i64, scratch_operands = 0 : i64, tpu.core_type = #tpu.core_type<tc>, window_params = [{transform_indices = @transform_0, window_bounds = array<i64: 1, 4, 128>}, {transform_indices = @transform_1, window_bounds = array<i64: 1, 4, 128>}, {pipeline_mode = #tpu.pipeline_mode<synchronous>, transform_indices = @transform_2, window_bounds = array<i64: 4, 4>}, {pipeline_mode = #tpu.pipeline_mode<synchronous>, transform_indices = @transform_3, window_bounds = array<i64: 4, 4>}, {pipeline_mode = #tpu.pipeline_mode<synchronous>, transform_indices = @transform_4, window_bounds = array<i64: 4, 1>}, {transform_indices = @transform_5, window_bounds = array<i64: 1, 4, 128>}]} {
    %c0 = arith.constant 0 : index
    %c0_0 = arith.constant 0 : index
    %0 = vector.load %arg4[%c0, %c0_0] : memref<4x4xf32, #tpu.memory_space<vmem>>, vector<4x4xf32>
    %c0_1 = arith.constant 0 : index
    %c0_2 = arith.constant 0 : index
    %c0_3 = arith.constant 0 : index
    %1 = vector.load %arg2[%c0_1, %c0_2, %c0_3] : memref<1x4x128xf32, #tpu.memory_space<vmem>>, vector<1x4x128xf32>
    %2 = vector.shape_cast %1 : vector<1x4x128xf32> to vector<4x128xf32>
    %cst = arith.constant dense<0.000000e+00> : vector<4x128xf32>
    %3 = tpu.matmul %0, %2, %cst {dimension_numbers = #tpu.dot_dimension_numbers<[1], [0], [0], [1], [0, 0, 1, 1], [], []>} : vector<4x4xf32>, vector<4x128xf32>, vector<4x128xf32> -> vector<4x128xf32>
    %c0_4 = arith.constant 0 : index
    %c0_5 = arith.constant 0 : index
    %4 = vector.load %arg5[%c0_4, %c0_5] : memref<4x4xf32, #tpu.memory_space<vmem>>, vector<4x4xf32>
    %c0_6 = arith.constant 0 : index
    %c0_7 = arith.constant 0 : index
    %c0_8 = arith.constant 0 : index
    %5 = vector.load %arg3[%c0_6, %c0_7, %c0_8] : memref<1x4x128xf32, #tpu.memory_space<vmem>>, vector<1x4x128xf32>
    %6 = vector.shape_cast %5 : vector<1x4x128xf32> to vector<4x128xf32>
    %cst_9 = arith.constant dense<0.000000e+00> : vector<4x128xf32>
    %7 = tpu.matmul %4, %6, %cst_9 {dimension_numbers = #tpu.dot_dimension_numbers<[1], [0], [0], [1], [0, 0, 1, 1], [], []>} : vector<4x4xf32>, vector<4x128xf32>, vector<4x128xf32> -> vector<4x128xf32>
    %8 = arith.addf %3, %7 : vector<4x128xf32>
    %c0_10 = arith.constant 0 : index
    %c0_11 = arith.constant 0 : index
    %9 = vector.load %arg6[%c0_10, %c0_11] : memref<4x1xf32, #tpu.memory_space<vmem>>, vector<4x1xf32>
    %10 = vector.broadcast %9 : vector<4x1xf32> to vector<4x128xf32>
    %11 = arith.addf %8, %10 : vector<4x128xf32>
    %cst_12 = arith.constant 0.000000e+00 : f32
    %12 = vector.broadcast %cst_12 : f32 to vector<4x128xf32>
    %13 = arith.maximumf %11, %12 : vector<4x128xf32>
    %c0_13 = arith.constant 0 : index
    %c0_14 = arith.constant 0 : index
    %c0_15 = arith.constant 0 : index
    %14 = vector.load %arg7[%c0_13, %c0_14, %c0_15] : memref<1x4x128xf32, #tpu.memory_space<vmem>>, vector<1x4x128xf32>
    %15 = vector.shape_cast %14 : vector<1x4x128xf32> to vector<4x128xf32>
    %16 = vector.shape_cast %13 : vector<4x128xf32> to vector<1x4x128xf32>
    tpu.vector_store %arg7[%c0_13, %c0_14, %c0_15], %16 {strides = array<i32>} : memref<1x4x128xf32, #tpu.memory_space<vmem>>, vector<1x4x128xf32>,
    return
  }
  func.func @transform_0(%arg0: i32, %arg1: i32) -> (i32, i32, i32) {
    %c0_i32 = arith.constant 0 : i32
    %c0_i32_0 = arith.constant 0 : i32
    return %arg0, %c0_i32, %arg1 : i32, i32, i32
  }
  func.func @transform_1(%arg0: i32, %arg1: i32) -> (i32, i32, i32) {
    %c0_i32 = arith.constant 0 : i32
    %c0_i32_0 = arith.constant 0 : i32
    return %arg0, %c0_i32, %arg1 : i32, i32, i32
  }
  func.func @transform_2(%arg0: i32, %arg1: i32) -> (i32, i32) {
    %c0_i32 = arith.constant 0 : i32
    %c0_i32_0 = arith.constant 0 : i32
    %c0_i32_1 = arith.constant 0 : i32
    return %c0_i32, %c0_i32_0 : i32, i32
  }
  func.func @transform_3(%arg0: i32, %arg1: i32) -> (i32, i32) {
    %c0_i32 = arith.constant 0 : i32
    %c0_i32_0 = arith.constant 0 : i32
    %c0_i32_1 = arith.constant 0 : i32
    return %c0_i32, %c0_i32_0 : i32, i32
  }
  func.func @transform_4(%arg0: i32, %arg1: i32) -> (i32, i32) {
    %c0_i32 = arith.constant 0 : i32
    %c0_i32_0 = arith.constant 0 : i32
    %c0_i32_1 = arith.constant 0 : i32
    return %c0_i32, %c0_i32_0 : i32, i32
  }
  func.func @transform_5(%arg0: i32, %arg1: i32) -> (i32, i32, i32) {
    %c0_i32 = arith.constant 0 : i32
    %c0_i32_0 = arith.constant 0 : i32
    return %arg0, %c0_i32, %arg1 : i32, i32, i32
  }
}

</mosaic_0001>

<llo_original>
// kernel: tpu_custom_call.1
$region0: #{tpu_custom_call.1}
  #allocation0 [shape = 'u32[]', space=smem, size = 0x4, offset = 0x4, fixed_abs, tag = 'smem constant byte address 0x4 - core index']
  #allocation1 [shape = 'u32[72,128]{1,0:T(1,128)}', space=vmem, size = 0x9000, scoped, tag = 'internal scratch']
  %s0 = inlined_call_operand.hbm [shape: f32[2,4,16], index: 0, kind: input, shape index: {}]
  %s1 = inlined_call_operand.hbm [shape: f32[2,4,16], index: 1, kind: input, shape index: {}]
  %s2 = inlined_call_operand.vmem [shape: f32[4,4], index: 2, kind: input, shape index: {}]
  %s3 = inlined_call_operand.hbm [shape: f32[4,4], index: 3, kind: input, shape index: {}]
  %s4 = inlined_call_operand.vmem [shape: f32[4,1], index: 4, kind: input, shape index: {}]
  %s5 = inlined_call_operand.hbm [shape: f32[2,4,16], index: 5, kind: output, shape index: {}]
  %s6 = sld [smem:[#allocation0]]
  $region65: #{tpu_custom_call.1} parent=0
    _
  %s8 = ssub.s32 1, %s6
  %s9 = scalar_select 0, %s8, %s6
  $region1: #{tpu_custom_call.1} parent=0
    #allocation2 [shape = 'u8[4096]{0}', space=vmem, size = 0x1000, scoped, tag = 'input window, operand 0']
    #allocation3 [shape = 's32[2]{0}', space=sflag, size = 0x8, scoped, tag = 'scoped memory for tpu_custom_call.1']
    #allocation4 [shape = 's32[2]{0}', space=sflag, size = 0x8, scoped, tag = 'scoped memory for tpu_custom_call.1']
    #allocation5 [shape = 'u8[4096]{0}', space=vmem, size = 0x1000, scoped, tag = 'input window, operand 1']
    #allocation6 [shape = 's32[2]{0}', space=sflag, size = 0x8, scoped, tag = 'scoped memory for tpu_custom_call.1']
    #allocation7 [shape = 'u8[2048]{0}', space=vmem, size = 0x800, scoped, tag = 'input window, operand 3, single buffered']
    #allocation8 [shape = 'u8[4096]{0}', space=vmem, size = 0x1000, scoped, tag = 'output window, operand 0']
    %10 = vsyncpa [#allocation3], 0
    %s11 = scalar_lea.sflag [#allocation3], 1
    %12 = vsyncpa %s11, 0
    %13 = vsyncpa [#allocation6], 0
    %s14 = scalar_lea.sflag [#allocation6], 1
    %15 = vsyncpa %s14, 0
    %16 = vsyncpa [#allocation4], 0
    %s17 = scalar_lea.sflag [#allocation4], 1
    %18 = vsyncpa %s17, 0
    loop: start=0, step=1, limit=4
    $region2: #{tpu_custom_call.1} parent=1 // loop_pre_header
      _
    $region3: #{tpu_custom_call.1} parent=1 // loop_header
      %s20 = sphi 0, %s24
      %p21 = scmp.ge.s32.totalorder %s20, 4
      %s27 = sphi 0, %s39
      %s28 = sphi 0, %s35
      %s29 = sphi 0, %s27
      %s30 = sphi 0, %s28
      %s31 = sphi 0, %s29
      %s32 = sphi 0, %s30
      %s44 = sphi 0, %s46
      %s47 = sphi 0, %s44
      %s48 = sphi 0, %s47
      %s64 = sphi 0, %s48
      %s72 = sphi 0, %s74
      %s75 = sphi 0, %s72
      %s76 = sphi 0, %s75
      %s92 = sphi 0, %s76
      %s96 = sphi 0, %s96
      %s98 = sphi 0, %s96
      %s99 = sphi 0, %s98
      %s113 = sphi 0, %s99
      %s117 = sphi 0, %s117
      %s119 = sphi 0, %s117
      %s120 = sphi 0, %s119
      %s134 = sphi 0, %s120
      %s138 = sphi 0, %s138
      %s140 = sphi 0, %s138
      %s141 = sphi 0, %s140
      %s155 = sphi 0, %s141
      %s163 = sphi 0, %s165
      %s166 = sphi 0, %s163
      %s167 = sphi 0, %s166
      %s183 = sphi 0, %s167
    $region4: #{tpu_custom_call.1} parent=1 // loop_header_branch
      %23 = sbr.rel (%p21) target = $region8
    $region5: #{tpu_custom_call.1} parent=1 // loop_body
      %s25 = ssub.s32 %s20, 1
      %s26 = ssub.s32 %s20, 2
      %s33 = sadd.s32 1, %s28
      %p34 = scmp.ge.s32.totalorder %s33, 1
      %s35 = scalar_select %p34, 0, %s33
      %s36 = sadd.s32 1, %s27
      %s37 = scalar_select %p34, %s36, %s27
      %p38 = scmp.ge.s32.totalorder %s37, 2
      %s39 = scalar_select %p38, 0, %s37
      %s40 = ssub.s32 %s27, %s39
      %s41 = ssub.s32 %s28, %s35
      %s42 = sor.u32 %s40, %s41
      %p43 = scmp.eq.s32.totalorder %s42, 0
      %s45 = sadd.s32 %s44, 1
      %s46 = scalar_select %p43, %s44, %s45
      %p49 = pneg %p43
      %p50 = scmp.eq.s32.totalorder %s20, 1
      %p51 = por %p49, %p50
      %p52 = scmp.ne.s32.totalorder %s44, %s47
      %p53 = scmp.eq.s32.totalorder %s20, 0
      %p54 = por %p52, %p53
      %p55 = scmp.ne.s32.totalorder %s44, %s47
      %p56 = scmp.eq.s32.totalorder %s25, 1
      %p57 = por %p55, %p56
      %p58 = scmp.ne.s32.totalorder %s47, %s48
      %p59 = scmp.eq.s32.totalorder %s25, 0
      %p60 = por %p58, %p59
      %p61 = scmp.ne.s32.totalorder %s47, %s48
      %p62 = scmp.eq.s32.totalorder %s26, 1
      %p63 = por %p61, %p62
      %p65 = scmp.ne.s32.totalorder %s48, %s64
      %p66 = scmp.eq.s32.totalorder %s26, 0
      %p67 = por %p65, %p66
      %s68 = ssub.s32 %s27, %s39
      %s69 = ssub.s32 %s28, %s35
      %s70 = sor.u32 %s68, %s69
      %p71 = scmp.eq.s32.totalorder %s70, 0
      %s73 = sadd.s32 %s72, 1
      %s74 = scalar_select %p71, %s72, %s73
      %p77 = pneg %p71
      %p78 = scmp.eq.s32.totalorder %s20, 1
      %p79 = por %p77, %p78
      %p80 = scmp.ne.s32.totalorder %s72, %s75
      %p81 = scmp.eq.s32.totalorder %s20, 0
      %p82 = por %p80, %p81
      %p83 = scmp.ne.s32.totalorder %s72, %s75
      %p84 = scmp.eq.s32.totalorder %s25, 1
      %p85 = por %p83, %p84
      %p86 = scmp.ne.s32.totalorder %s75, %s76
      %p87 = scmp.eq.s32.totalorder %s25, 0
      %p88 = por %p86, %p87
      %p89 = scmp.ne.s32.totalorder %s75, %s76
      %p90 = scmp.eq.s32.totalorder %s26, 1
      %p91 = por %p89, %p90
      %p93 = scmp.ne.s32.totalorder %s76, %s92
      %p94 = scmp.eq.s32.totalorder %s26, 0
      %p95 = por %p93, %p94
      %s97 = sadd.s32 %s96, 1
      %p100 = scmp.eq.s32.totalorder %s20, 1
      %p101 = scmp.ne.s32.totalorder %s96, %s98
      %p102 = scmp.eq.s32.totalorder %s20, 0
      %p103 = por %p101, %p102
      %p104 = scmp.ne.s32.totalorder %s96, %s98
      %p105 = scmp.eq.s32.totalorder %s25, 1
      %p106 = por %p104, %p105
      %p107 = scmp.ne.s32.totalorder %s98, %s99
      %p108 = scmp.eq.s32.totalorder %s25, 0
      %p109 = por %p107, %p108
      %p110 = scmp.ne.s32.totalorder %s98, %s99
      %p111 = scmp.eq.s32.totalorder %s26, 1
      %p112 = por %p110, %p111
      %p114 = scmp.ne.s32.totalorder %s99, %s113
      %p115 = scmp.eq.s32.totalorder %s26, 0
      %p116 = por %p114, %p115
      %s118 = sadd.s32 %s117, 1
      %p121 = scmp.eq.s32.totalorder %s20, 1
      %p122 = scmp.ne.s32.totalorder %s117, %s119
      %p123 = scmp.eq.s32.totalorder %s20, 0
      %p124 = por %p122, %p123
      %p125 = scmp.ne.s32.totalorder %s117, %s119
      %p126 = scmp.eq.s32.totalorder %s25, 1
      %p127 = por %p125, %p126
      %p128 = scmp.ne.s32.totalorder %s119, %s120
      %p129 = scmp.eq.s32.totalorder %s25, 0
      %p130 = por %p128, %p129
      %p131 = scmp.ne.s32.totalorder %s119, %s120
      %p132 = scmp.eq.s32.totalorder %s26, 1
      %p133 = por %p131, %p132
      %p135 = scmp.ne.s32.totalorder %s120, %s134
      %p136 = scmp.eq.s32.totalorder %s26, 0
      %p137 = por %p135, %p136
      %s139 = sadd.s32 %s138, 1
      %p142 = scmp.eq.s32.totalorder %s20, 1
      %p143 = scmp.ne.s32.totalorder %s138, %s140
      %p144 = scmp.eq.s32.totalorder %s20, 0
      %p145 = por %p143, %p144
      %p146 = scmp.ne.s32.totalorder %s138, %s140
      %p147 = scmp.eq.s32.totalorder %s25, 1
      %p148 = por %p146, %p147
      %p149 = scmp.ne.s32.totalorder %s140, %s141
      %p150 = scmp.eq.s32.totalorder %s25, 0
      %p151 = por %p149, %p150
      %p152 = scmp.ne.s32.totalorder %s140, %s141
      %p153 = scmp.eq.s32.totalorder %s26, 1
      %p154 = por %p152, %p153
      %p156 = scmp.ne.s32.totalorder %s141, %s155
      %p157 = scmp.eq.s32.totalorder %s26, 0
      %p158 = por %p156, %p157
      %s159 = ssub.s32 %s27, %s39
      %s160 = ssub.s32 %s28, %s35
      %s161 = sor.u32 %s159, %s160
      %p162 = scmp.eq.s32.totalorder %s161, 0
      %s164 = sadd.s32 %s163, 1
      %s165 = scalar_select %p162, %s163, %s164
      %p168 = pneg %p162
      %p169 = scmp.eq.s32.totalorder %s20, 1
      %p170 = por %p168, %p169
      %p171 = scmp.ne.s32.totalorder %s163, %s166
      %p172 = scmp.eq.s32.totalorder %s20, 0
      %p173 = por %p171, %p172
      %p174 = scmp.ne.s32.totalorder %s163, %s166
      %p175 = scmp.eq.s32.totalorder %s25, 1
      %p176 = por %p174, %p175
      %p177 = scmp.ne.s32.totalorder %s166, %s167
      %p178 = scmp.eq.s32.totalorder %s25, 0
      %p179 = por %p177, %p178
      %p180 = scmp.ne.s32.totalorder %s166, %s167
      %p181 = scmp.eq.s32.totalorder %s26, 1
      %p182 = por %p180, %p181
      %p184 = scmp.ne.s32.totalorder %s167, %s183
      %p185 = scmp.eq.s32.totalorder %s26, 0
      %p186 = por %p184, %p185
      %p187 = scmp.le.s32.totalorder 1, %s20
      %p188 = scmp.lt.s32.totalorder %s20, 3
      %p189 = pnand %p187, %p188
      %p190 = pneg %p189
      // Predicated region
      $region9: #{tpu_custom_call.1} parent=5 // pred_check
        _
      $region10: #{tpu_custom_call.1} parent=5 // pred_check_branch
        %192 = sbr.rel (%p189) target = $region12
      $region11: #{tpu_custom_call.1} parent=5 // pred_region
        %s193 = ssub.s32 %s20, 1
        // Predicated region
        $region13: #{tpu_custom_call.1} parent=11 // pred_check
          %p194 = pneg %p109
        $region14: #{tpu_custom_call.1} parent=11 // pred_check_branch
          %196 = sbr.rel (%p194) target = $region16
        $region15: #{tpu_custom_call.1} parent=11 // pred_region
          _
        $region16: #{tpu_custom_call.1} parent=11 // pred_fallthru
          _
        // Predicated region
        $region17: #{tpu_custom_call.1} parent=11 // pred_check
          %p197 = pneg %p130
        $region18: #{tpu_custom_call.1} parent=11 // pred_check_branch
          %199 = sbr.rel (%p197) target = $region20
        $region19: #{tpu_custom_call.1} parent=11 // pred_region
          %201 = vsyncadd [#allocation6], 0
          %s203 = sshll.u32 %s3, 4
          %s204 = int_to_ptr.hbm [resolvable:$true] %s203
          %s205 = sshll.u32 [#allocation7], 4
          %s206 = int_to_ptr.vmem [resolvable:$true] %s205
          %208 = dma.hbm_to_vmem [thread:$0]  %s204, 64, %s206, [#allocation6]
        $region20: #{tpu_custom_call.1} parent=11 // pred_fallthru
          _
        // Predicated region
        $region21: #{tpu_custom_call.1} parent=11 // pred_check
          %p209 = pneg %p151
        $region22: #{tpu_custom_call.1} parent=11 // pred_check_branch
          %211 = sbr.rel (%p209) target = $region24
        $region23: #{tpu_custom_call.1} parent=11 // pred_region
          _
        $region24: #{tpu_custom_call.1} parent=11 // pred_fallthru
          _
      $region12: #{tpu_custom_call.1} parent=5 // pred_fallthru
        _
      %p212 = scmp.lt.s32.totalorder %s20, 2
      // Predicated region
      $region25: #{tpu_custom_call.1} parent=5 // pred_check
        %p213 = pneg %p212
      $region26: #{tpu_custom_call.1} parent=5 // pred_check_branch
        %215 = sbr.rel (%p213) target = $region28
      $region27: #{tpu_custom_call.1} parent=5 // pred_region
        // Predicated region
        $region29: #{tpu_custom_call.1} parent=27 // pred_check
          %p216 = pneg %p54
        $region30: #{tpu_custom_call.1} parent=27 // pred_check_branch
          %218 = sbr.rel (%p216) target = $region32
        $region31: #{tpu_custom_call.1} parent=27 // pred_region
          %s219 = sand.u32 %s44, 1
          %s220 = scalar_lea.sflag [#allocation3], %s219
          %s221 = sand.u32 %s44, 1
          %s222 = smul.addr %s221, 4
          %s223 = scalar_lea.vmem [#allocation2], %s222
          %225 = vsyncadd %s220, 0
          %s226 = sadd.s32 %s28, %s27
          %s227 = smul.addr %s226, 4
          %s228 = scalar_lea.hbm %s0, %s227
          %s230 = sshll.u32 %s228, 4
          %s231 = int_to_ptr.hbm [resolvable:$true] %s230
          %s232 = sshll.u32 %s223, 4
          %s233 = int_to_ptr.vmem [resolvable:$true] %s232
          %235 = dma.hbm_to_vmem [thread:$0]  %s231, 64, %s233, %s220
        $region32: #{tpu_custom_call.1} parent=27 // pred_fallthru
          _
        // Predicated region
        $region33: #{tpu_custom_call.1} parent=27 // pred_check
          %p236 = pneg %p82
        $region34: #{tpu_custom_call.1} parent=27 // pred_check_branch
          %238 = sbr.rel (%p236) target = $region36
        $region35: #{tpu_custom_call.1} parent=27 // pred_region
          %s239 = sand.u32 %s20, 1
          %s240 = scalar_lea.sflag [#allocation6], %s239
          %s241 = sand.u32 %s72, 1
          %s242 = smul.addr %s241, 4
          %s243 = scalar_lea.vmem [#allocation5], %s242
          %245 = vsyncadd %s240, 0
          %s246 = sadd.s32 %s28, %s27
          %s247 = smul.addr %s246, 4
          %s248 = scalar_lea.hbm %s1, %s247
          %s250 = sshll.u32 %s248, 4
          %s251 = int_to_ptr.hbm [resolvable:$true] %s250
          %s252 = sshll.u32 %s243, 4
          %s253 = int_to_ptr.vmem [resolvable:$true] %s252
          %255 = dma.hbm_to_vmem [thread:$0]  %s251, 64, %s253, %s240
        $region36: #{tpu_custom_call.1} parent=27 // pred_fallthru
          _
      $region28: #{tpu_custom_call.1} parent=5 // pred_fallthru
        _
      %p256 = scmp.le.s32.totalorder 1, %s20
      %p257 = scmp.lt.s32.totalorder %s20, 3
      %p258 = pnand %p256, %p257
      %p259 = pneg %p258
      // Predicated region
      $region37: #{tpu_custom_call.1} parent=5 // pred_check
        _
      $region38: #{tpu_custom_call.1} parent=5 // pred_check_branch
        %261 = sbr.rel (%p258) target = $region40
      $region39: #{tpu_custom_call.1} parent=5 // pred_region
        %s262 = ssub.s32 %s20, 1
        %s263 = sand.u32 %s47, 1
        %s264 = scalar_lea.sflag [#allocation3], %s263
        %s265 = sand.u32 %s47, 1
        %s266 = smul.addr %s265, 4
        %s267 = scalar_lea.vmem [#allocation2], %s266
        // Predicated region
        $region41: #{tpu_custom_call.1} parent=39 // pred_check
          %p268 = pneg %p60
        $region42: #{tpu_custom_call.1} parent=39 // pred_check_branch
          %270 = sbr.rel (%p268) target = $region44
        $region43: #{tpu_custom_call.1} parent=39 // pred_region
          %272 = dma.done %s264, 64
        $region44: #{tpu_custom_call.1} parent=39 // pred_fallthru
          _
        %s273 = sand.u32 %s25, 1
        %s274 = scalar_lea.sflag [#allocation6], %s273
        %s275 = sand.u32 %s75, 1
        %s276 = smul.addr %s275, 4
        %s277 = scalar_lea.vmem [#allocation5], %s276
        // Predicated region
        $region45: #{tpu_custom_call.1} parent=39 // pred_check
          %p278 = pneg %p88
        $region46: #{tpu_custom_call.1} parent=39 // pred_check_branch
          %280 = sbr.rel (%p278) target = $region48
        $region47: #{tpu_custom_call.1} parent=39 // pred_region
          %282 = dma.done %s274, 64
        $region48: #{tpu_custom_call.1} parent=39 // pred_fallthru
          _
        // Predicated region
        $region49: #{tpu_custom_call.1} parent=39 // pred_check
          %p283 = pneg %p130
        $region50: #{tpu_custom_call.1} parent=39 // pred_check_branch
          %285 = sbr.rel (%p283) target = $region52
        $region51: #{tpu_custom_call.1} parent=39 // pred_region
          %287 = dma.done [#allocation6], 64
        $region52: #{tpu_custom_call.1} parent=39 // pred_fallthru
          _
        %s288 = sand.u32 %s47, 1
        %s289 = scalar_lea.sflag [#allocation3], %s288
        %s290 = sand.u32 %s47, 1
        %s291 = smul.addr %s290, 4
        %s292 = scalar_lea.vmem [#allocation2], %s291
        %p293 = pneg %p60
        %p294 = pneg %p57
        %s295 = sand.u32 %s25, 1
        %s296 = scalar_lea.sflag [#allocation6], %s295
        %s297 = sand.u32 %s75, 1
        %s298 = smul.addr %s297, 4
        %s299 = scalar_lea.vmem [#allocation5], %s298
        %p300 = pneg %p88
        %p301 = pneg %p85
        %p302 = pneg %p109
        %p303 = pneg %p106
        %p304 = pneg %p130
        %p305 = pneg %p127
        %p306 = pneg %p151
        %p307 = pneg %p148
        %p308 = pneg %p179
        %p309 = pneg %p176
        %s310 = sand.u32 %s166, 1
        %s311 = scalar_lea.sflag [#allocation4], %s310
        %s312 = sand.u32 %s166, 1
        %s313 = smul.addr %s312, 4
        %s314 = scalar_lea.vmem [#allocation8], %s313
        %v315 = vld [vmem:[%s2] sm:$0xf]
        %v316 = vld [vmem:[%s267] sm:$0xf]
        %v317 = vld [vmem:[#allocation7] sm:$0xf]
        %v318 = vld [vmem:[%s277] sm:$0xf]
        %vm319 = vcmask 31744
        %v321 = vsel %vm319, %v317, 0
        %vm323 = vcmask 1043456
        %v325 = vsel %vm323, %v318, 0
        %327 = vmatpush.msra.mxu0 0.0
        %328 = vmatpush.msra.mxu0 0.0
        %329 = vmatpush.msra.mxu0 0.0
        %330 = vmatpush.msra.mxu0 0.0
        %331 = vmatpush.msra.mxu0 0.0
        %332 = vmatpush.msra.mxu0 0.0
        %333 = vmatpush.msra.mxu0 0.0
        %334 = vmatpush.msra.mxu0 0.0
        %335 = vmatpush.msra.mxu0 0.0
        %336 = vmatpush.msra.mxu0 0.0
        %337 = vmatpush.msra.mxu0 0.0
        %338 = vmatpush.msra.mxu0 0.0
        %339 = vmatpush.msra.mxu0 0.0
        %340 = vmatpush.msra.mxu0 0.0
        %341 = vmatpush.msra.mxu0 0.0
        %342 = vmatpush.msra.mxu0 %v325
        %343 = vmatmul.f32.gmra.mxu0 %v321
        %v344 = vpop.f32.mrf.mxu0
        %v345 = vadd.f32 0.0, %v344
        %346 = vdwg.mxu0
        %v348 = vsel %vm319, %v315, 0
        %v351 = vsel %vm323, %v316, 0
        %353 = vmatpush.msra.mxu0 0.0
        %354 = vmatpush.msra.mxu0 0.0
        %355 = vmatpush.msra.mxu0 0.0
        %356 = vmatpush.msra.mxu0 0.0
        %357 = vmatpush.msra.mxu0 0.0
        %358 = vmatpush.msra.mxu0 0.0
        %359 = vmatpush.msra.mxu0 0.0
        %360 = vmatpush.msra.mxu0 0.0
        %361 = vmatpush.msra.mxu0 0.0
        %362 = vmatpush.msra.mxu0 0.0
        %363 = vmatpush.msra.mxu0 0.0
        %364 = vmatpush.msra.mxu0 0.0
        %365 = vmatpush.msra.mxu0 0.0
        %366 = vmatpush.msra.mxu0 0.0
        %367 = vmatpush.msra.mxu0 0.0
        %368 = vmatpush.msra.mxu0 %v351
        %369 = vmatmul.f32.gmra.mxu0 %v348
        %v370 = vpop.f32.mrf.mxu0
        %v371 = vadd.f32 %v345, %v370
        %372 = vdwg.mxu0
        %v373 = vld [vmem:[%s4] sm:$0xf]
        %375 = vset.pattern.permute.xlu0 0
        %376 = vperm.xlu0 %375, %v373
        %v377 = vpop.permute.xlu0 %376
        %v379 = vadd.f32 %v371, %v377
        %v380 = vmax.f32 %v379, 0.0
        %381 = vst [vmem:[%s314] sm:$0xf] %v380
        %s382 = sand.u32 %s166, 1
        %s383 = scalar_lea.sflag [#allocation4], %s382
        %s384 = sand.u32 %s166, 1
        %s385 = smul.addr %s384, 4
        %s386 = scalar_lea.vmem [#allocation8], %s385
        // Predicated region
        $region53: #{tpu_custom_call.1} parent=39 // pred_check
          %p387 = pneg %p176
        $region54: #{tpu_custom_call.1} parent=39 // pred_check_branch
          %389 = sbr.rel (%p387) target = $region56
        $region55: #{tpu_custom_call.1} parent=39 // pred_region
          %391 = vsyncadd %s383, 0
          %s392 = sadd.s32 %s30, %s29
          %s393 = smul.addr %s392, 4
          %s394 = scalar_lea.hbm %s5, %s393
          %s396 = sshll.u32 %s386, 4
          %s397 = int_to_ptr.vmem [resolvable:$true] %s396
          %s398 = sshll.u32 %s394, 4
          %s399 = int_to_ptr.hbm [resolvable:$true] %s398
          %401 = dma.vmem_to_hbm [thread:$0]  %s397, 64, %s399, %s383
        $region56: #{tpu_custom_call.1} parent=39 // pred_fallthru
          _
      $region40: #{tpu_custom_call.1} parent=5 // pred_fallthru
        _
      %p402 = scmp.le.s32.totalorder 2, %s20
      // Predicated region
      $region57: #{tpu_custom_call.1} parent=5 // pred_check
        %p403 = pneg %p402
      $region58: #{tpu_custom_call.1} parent=5 // pred_check_branch
        %405 = sbr.rel (%p403) target = $region60
      $region59: #{tpu_custom_call.1} parent=5 // pred_region
        %s406 = ssub.s32 %s20, 2
        // Predicated region
        $region61: #{tpu_custom_call.1} parent=59 // pred_check
          %p407 = pneg %p182
        $region62: #{tpu_custom_call.1} parent=59 // pred_check_branch
          %409 = sbr.rel (%p407) target = $region64
        $region63: #{tpu_custom_call.1} parent=59 // pred_region
          %s410 = sand.u32 %s167, 1
          %s411 = scalar_lea.sflag [#allocation4], %s410
          %s412 = sand.u32 %s167, 1
          %s413 = smul.addr %s412, 4
          %s414 = scalar_lea.vmem [#allocation8], %s413
          %416 = dma.done %s411, 64
        $region64: #{tpu_custom_call.1} parent=59 // pred_fallthru
          _
      $region60: #{tpu_custom_call.1} parent=5 // pred_fallthru
        _
    $region6: #{tpu_custom_call.1} parent=1 // loop_footer
      %s24 = sadd.s32 1, %s20
    $region7: #{tpu_custom_call.1} parent=1 // loop_footer_branch
      %19 = sbr.rel target = $region3
    $region8: #{tpu_custom_call.1} parent=1 // loop_exit
      _
    %417 = vsyncpa [#allocation3], 1
    %s418 = scalar_lea.sflag [#allocation3], 1
    %419 = vsyncpa %s418, 1
    %420 = vsyncpa [#allocation6], 1
    %s421 = scalar_lea.sflag [#allocation6], 1
    %422 = vsyncpa %s421, 1
    %423 = vsyncpa [#allocation4], 1
    %s424 = scalar_lea.sflag [#allocation4], 1
    %425 = vsyncpa %s424, 1

</llo_original>
